<compile_context>
chip_gen: v7x
topology: tpu7x:2x2x1
jax: 0.10.0
libtpu: 0.0.40
codegen_flags: <defaults>
</compile_context>

<pallas_src>
import math
from functools import partial

import jax
import jax.numpy as jnp
from jax import lax
from jax.experimental import pallas as pl
from jax.experimental.pallas import tpu as pltpu

_EPS = 1e-12  # torch F.normalize eps for the float32 path of the reference


def ppt_head_kernel(feat_ref, w_ref, b_ref, wc_ref, bc_ref, out_ref):
    # feat_ref: (TN, C_in) f32   (cast to bf16 in-kernel for the MXU)
    # w_ref:    (C_in, D)  bf16  proj_head weight
    # b_ref:    (1, D)     f32   proj_head bias
    # wc_ref:   (C_in, Kp) bf16  proj_w @ (exp(logit_scale) * E^T), lane-padded
    # bc_ref:   (1, Kp)    f32   proj_b @ (exp(logit_scale) * E^T), lane-padded
    # out_ref:  (TN, Kp)   bf16
    feat = feat_ref[...].astype(jnp.bfloat16)

    # proj is only needed for the L2-norm denominator.
    proj = jnp.dot(feat, w_ref[...], preferred_element_type=jnp.float32) + b_ref[...]
    sumsq = jnp.sum(proj * proj, axis=-1, keepdims=True)
    # F.normalize(x, p=2, dim=-1, eps): x / max(||x||_2, eps)  ->  rsqrt on EUP.
    inv_norm = lax.rsqrt(jnp.maximum(sumsq, _EPS * _EPS))

    # normalize is linear, so: normalize(proj) @ E = (proj @ E) * inv_norm
    #                        = (feat @ (W@E) + b@E) * inv_norm
    sim = jnp.dot(feat, wc_ref[...], preferred_element_type=jnp.float32) + bc_ref[...]
    out_ref[...] = (sim * inv_norm).astype(out_ref.dtype)


def _round_up(x, m):
    return (x + m - 1) // m * m


@partial(jax.jit, static_argnames=("num_valid", "tile_n", "out_dtype"))
def ppt_head(feat, proj_w_bf16, proj_b_f32, wc_bf16, bc_f32, *,
             num_valid, tile_n=4096, out_dtype=jnp.bfloat16):
    """feat: [N, C_in] f32; returns seg_logits [N, num_valid] in out_dtype."""
    n, c_in = feat.shape
    d = proj_w_bf16.shape[1]
    k_pad = wc_bf16.shape[1]
    out_itemsize = jnp.dtype(out_dtype).itemsize

    n8 = _round_up(max(n, 8), 8)

    # Tile selection:
    #  * cap by a VMEM budget (f32 feat tile + f32 proj intermediate + out tile,
    #    inputs/outputs double-buffered) that fits v5e's 16 MiB scoped default
    #    and leaves headroom on v7x's smaller VMEM.
    bytes_per_row = 2 * (c_in * 4 + k_pad * out_itemsize) + d * 4
    budget = 12 * 1024 * 1024
    tile = min(tile_n, n8, max(8, (budget // bytes_per_row) // 8 * 8))
    #  * keep >= 2 grid steps so the 'parallel' axis can shard across v7x's 2 TCs.
    if tile >= n8 and n8 >= 16:
        tile = _round_up((n8 + 1) // 2, 8)
    tile = max(8, (tile // 8) * 8)
    n_pad = _round_up(n8, tile)

    feat_in = feat
    if n_pad != n:
        # Zero rows: proj == bias, norm > 0, harmless; sliced off below.
        feat_in = jnp.pad(feat, ((0, n_pad - n), (0, 0)))

    out = pl.pallas_call(
        ppt_head_kernel,
        out_shape=jax.ShapeDtypeStruct((n_pad, k_pad), out_dtype),
        grid_spec=pltpu.PrefetchScalarGridSpec(
            num_scalar_prefetch=0,
            grid=(n_pad // tile,),
            in_specs=[
                pl.BlockSpec((tile, c_in), lambda i: (i, 0)),   # feat tile (f32)
                pl.BlockSpec((c_in, d), lambda i: (0, 0)),      # proj weight
                pl.BlockSpec((1, d), lambda i: (0, 0)),         # proj bias
                pl.BlockSpec((c_in, k_pad), lambda i: (0, 0)),  # fused W @ E
                pl.BlockSpec((1, k_pad), lambda i: (0, 0)),     # fused b @ E
            ],
            out_specs=pl.BlockSpec((tile, k_pad), lambda i: (i, 0)),
        ),
        compiler_params=pltpu.CompilerParams(
            dimension_semantics=("parallel",)),
    )(feat_in, proj_w_bf16, proj_b_f32, wc_bf16, bc_f32)

    # Single fused slice (rows + valid classes) under the same jit.
    return out[:n, :num_valid]


class PointPromptTrainingJAX:
    """JAX/Pallas re-implementation of the PPT-v1m3 head (inference path)."""

    def __init__(self, key, backbone_out_channels=32, clip_dim=64,
                 conditions=("Structured3D", "ScanNet", "S3DIS"),
                 num_classes=(25, 20, 13)):
        self.conditions = conditions
        self.num_classes = list(num_classes)
        k_w, k_b, k_e = jax.random.split(key, 3)

        # proj_head: nn.Linear(backbone_out_channels, clip_dim)
        bound = 1.0 / math.sqrt(backbone_out_channels)
        self.proj_w = jax.random.uniform(
            k_w, (backbone_out_channels, clip_dim), jnp.float32, -bound, bound)
        self.proj_b = jax.random.uniform(
            k_b, (1, clip_dim), jnp.float32, -bound, bound)

        # class_embeddings buffer: CLIP text embeddings, L2-normalized rows.
        total = sum(self.num_classes)
        emb = jax.random.normal(k_e, (total, clip_dim), jnp.float32)
        emb = emb / jnp.linalg.norm(emb, axis=-1, keepdims=True)
        self.class_embeddings = emb

        # CLIP logit_scale init: ln(1 / 0.07)
        self.logit_scale = jnp.float32(math.log(1.0 / 0.07))

        # ---- One-time constant transforms for the kernel ----
        # NOTE: exp(logit_scale) and the embeddings are folded into the proj
        # head at init -- correct for frozen inference, stale if trained.
        self.proj_w_bf16 = self.proj_w.astype(jnp.bfloat16)
        self.proj_b_f32 = self.proj_b

        scale = jnp.exp(self.logit_scale)
        k_pad = _round_up(max(self.num_classes), 128)
        self.k_pad = k_pad
        wc_list, bc_list = [], []
        for i, k in enumerate(self.num_classes):
            start = sum(self.num_classes[:i])
            e_dk = (scale * self.class_embeddings[start:start + k]).T   # [D, K]
            e_dk = jnp.pad(e_dk, ((0, 0), (0, k_pad - k)))              # [D, Kp]
            wc_list.append((self.proj_w @ e_dk).astype(jnp.bfloat16))   # [C_in, Kp]
            bc_list.append((self.proj_b @ e_dk).astype(jnp.float32))    # [1, Kp]
        self.wc_bf16 = jnp.stack(wc_list, axis=0)   # [ncond, C_in, Kp]
        self.bc_f32 = jnp.stack(bc_list, axis=0)    # [ncond, 1, Kp]

    def forward(self, feat, condition):
        idx = self.conditions.index(condition)
        k = self.num_classes[idx]
        seg_logits = ppt_head(
            feat, self.proj_w_bf16, self.proj_b_f32,
            self.wc_bf16[idx], self.bc_f32[idx], num_valid=k)
        return {"seg_logits": seg_logits}


if __name__ == "__main__":
    key = jax.random.PRNGKey(0)
    k_model, k_feat = jax.random.split(key)

    N = 128                     # number of points (backbone output rows)
    C_IN = 32                   # backbone_out_channels (small synthetic)
    CLIP_DIM = 64               # CLIP text-projection dim (small synthetic)

    model = PointPromptTrainingJAX(k_model, backbone_out_channels=C_IN,
                                   clip_dim=CLIP_DIM)

    # Synthetic backbone output features (stand-in for point.feat).
    feat = jax.random.normal(k_feat, (N, C_IN), jnp.float32)

    out = model.forward(feat, condition="ScanNet")
    seg_logits = jax.block_until_ready(out["seg_logits"])

    # Sanity-check against a pure-JAX f32 reference of the same math.
    proj = feat @ model.proj_w + model.proj_b
    normed = proj / jnp.maximum(
        jnp.linalg.norm(proj, axis=-1, keepdims=True), 1e-12)
    ref = jnp.exp(model.logit_scale) * (
        normed @ model.class_embeddings[25:45].T)

    assert seg_logits.shape == (N, 20)
    # bf16 MXU operands + bf16 output -> loose tolerance vs. the f32 reference.
    diff = jnp.abs(seg_logits.astype(jnp.float32) - ref)
    assert jnp.all(diff <= 0.5 + 0.05 * jnp.abs(ref)), float(jnp.max(diff))

    print("KERNEL_OK")
</pallas_src>

<mosaic_0001>
module attributes {stable_mosaic.version = 11 : i64} {
  func.func @ppt_head_kernel(%arg0: i32, %arg1: memref<64x32xf32, #tpu.memory_space<vmem>>, %arg2: memref<32x64xbf16, #tpu.memory_space<vmem>>, %arg3: memref<1x64xf32, #tpu.memory_space<vmem>>, %arg4: memref<32x128xbf16, #tpu.memory_space<vmem>>, %arg5: memref<1x128xf32, #tpu.memory_space<vmem>>, %arg6: memref<64x128xbf16, #tpu.memory_space<vmem>>) attributes {dimension_semantics = [#tpu.dimension_semantics<parallel>], iteration_bounds = array<i64: 2>, scalar_prefetch = 0 : i64, scratch_operands = 0 : i64, tpu.core_type = #tpu.core_type<tc>, window_params = [{transform_indices = @transform_0, window_bounds = array<i64: 64, 32>}, {pipeline_mode = #tpu.pipeline_mode<synchronous>, transform_indices = @transform_1, window_bounds = array<i64: 32, 64>}, {pipeline_mode = #tpu.pipeline_mode<synchronous>, transform_indices = @transform_2, window_bounds = array<i64: 1, 64>}, {pipeline_mode = #tpu.pipeline_mode<synchronous>, transform_indices = @transform_3, window_bounds = array<i64: 32, 128>}, {pipeline_mode = #tpu.pipeline_mode<synchronous>, transform_indices = @transform_4, window_bounds = array<i64: 1, 128>}, {transform_indices = @transform_5, window_bounds = array<i64: 64, 128>}]} {
    %c0 = arith.constant 0 : index
    %c0_0 = arith.constant 0 : index
    %0 = vector.load %arg1[%c0, %c0_0] : memref<64x32xf32, #tpu.memory_space<vmem>>, vector<64x32xf32>
    %1 = arith.truncf %0 : vector<64x32xf32> to vector<64x32xbf16>
    %c0_1 = arith.constant 0 : index
    %c0_2 = arith.constant 0 : index
    %2 = vector.load %arg2[%c0_1, %c0_2] : memref<32x64xbf16, #tpu.memory_space<vmem>>, vector<32x64xbf16>
    %cst = arith.constant dense<0.000000e+00> : vector<64x64xf32>
    %3 = tpu.matmul %1, %2, %cst {dimension_numbers = #tpu.dot_dimension_numbers<[1], [0], [0], [1], [0, 0, 1, 1], [], []>} : vector<64x32xbf16>, vector<32x64xbf16>, vector<64x64xf32> -> vector<64x64xf32>
    %c0_3 = arith.constant 0 : index
    %c0_4 = arith.constant 0 : index
    %4 = vector.load %arg3[%c0_3, %c0_4] : memref<1x64xf32, #tpu.memory_space<vmem>>, vector<1x64xf32>
    %5 = vector.broadcast %4 : vector<1x64xf32> to vector<64x64xf32>
    %6 = arith.addf %3, %5 : vector<64x64xf32>
    %7 = arith.mulf %6, %6 : vector<64x64xf32>
    %cst_5 = arith.constant dense<0.000000e+00> : vector<64xf32>
    %8 = vector.multi_reduction <add>, %7, %cst_5 [1] : vector<64x64xf32> to vector<64xf32>
    %9 = vector.shape_cast %8 : vector<64xf32> to vector<64x1xf32>
    %cst_6 = arith.constant 1.000000e-24 : f32
    %10 = vector.broadcast %cst_6 : f32 to vector<64x1xf32>
    %11 = arith.maximumf %9, %10 : vector<64x1xf32>
    %12 = math.rsqrt %11 : vector<64x1xf32>
    %c0_7 = arith.constant 0 : index
    %c0_8 = arith.constant 0 : index
    %13 = vector.load %arg4[%c0_7, %c0_8] : memref<32x128xbf16, #tpu.memory_space<vmem>>, vector<32x128xbf16>
    %cst_9 = arith.constant dense<0.000000e+00> : vector<64x128xf32>
    %14 = tpu.matmul %1, %13, %cst_9 {dimension_numbers = #tpu.dot_dimension_numbers<[1], [0], [0], [1], [0, 0, 1, 1], [], []>} : vector<64x32xbf16>, vector<32x128xbf16>, vector<64x128xf32> -> vector<64x128xf32>
    %c0_10 = arith.constant 0 : index
    %c0_11 = arith.constant 0 : index
    %15 = vector.load %arg5[%c0_10, %c0_11] : memref<1x128xf32, #tpu.memory_space<vmem>>, vector<1x128xf32>
    %16 = vector.broadcast %15 : vector<1x128xf32> to vector<64x128xf32>
    %17 = arith.addf %14, %16 : vector<64x128xf32>
    %18 = vector.broadcast %12 : vector<64x1xf32> to vector<64x128xf32>
    %19 = arith.mulf %17, %18 : vector<64x128xf32>
    %20 = arith.truncf %19 : vector<64x128xf32> to vector<64x128xbf16>
    %c0_12 = arith.constant 0 : index
    %c0_13 = arith.constant 0 : index
    %21 = vector.load %arg6[%c0_12, %c0_13] : memref<64x128xbf16, #tpu.memory_space<vmem>>, vector<64x128xbf16>
    tpu.vector_store %arg6[%c0_12, %c0_13], %20 {strides = array<i32>} : memref<64x128xbf16, #tpu.memory_space<vmem>>, vector<64x128xbf16>,
    return
  }
  func.func @transform_0(%arg0: i32) -> (i32, i32) {
    %c0_i32 = arith.constant 0 : i32
    %c0_i32_0 = arith.constant 0 : i32
    return %arg0, %c0_i32 : i32, i32
  }
  func.func @transform_1(%arg0: i32) -> (i32, i32) {
    %c0_i32 = arith.constant 0 : i32
    %c0_i32_0 = arith.constant 0 : i32
    %c0_i32_1 = arith.constant 0 : i32
    return %c0_i32, %c0_i32_0 : i32, i32
  }
  func.func @transform_2(%arg0: i32) -> (i32, i32) {
    %c0_i32 = arith.constant 0 : i32
    %c0_i32_0 = arith.constant 0 : i32
    %c0_i32_1 = arith.constant 0 : i32
    return %c0_i32, %c0_i32_0 : i32, i32
  }
  func.func @transform_3(%arg0: i32) -> (i32, i32) {
    %c0_i32 = arith.constant 0 : i32
    %c0_i32_0 = arith.constant 0 : i32
    %c0_i32_1 = arith.constant 0 : i32
    return %c0_i32, %c0_i32_0 : i32, i32
  }
  func.func @transform_4(%arg0: i32) -> (i32, i32) {
    %c0_i32 = arith.constant 0 : i32
    %c0_i32_0 = arith.constant 0 : i32
    %c0_i32_1 = arith.constant 0 : i32
    return %c0_i32, %c0_i32_0 : i32, i32
  }
  func.func @transform_5(%arg0: i32) -> (i32, i32) {
    %c0_i32 = arith.constant 0 : i32
    %c0_i32_0 = arith.constant 0 : i32
    return %arg0, %c0_i32 : i32, i32
  }
}

</mosaic_0001>

<llo_original>
// kernel: ppt_head.1
$region0: #{ppt_head.1}
  #allocation0 [shape = 'u32[]', space=smem, size = 0x4, offset = 0x4, fixed_abs, tag = 'smem constant byte address 0x4 - core index']
  #allocation1 [shape = 'u32[144,128]{1,0:T(1,128)}', space=vmem, size = 0x12000, scoped, tag = 'internal scratch']
  %s0 = inlined_call_operand.vmem [shape: f32[128,32], index: 0, kind: input, shape index: {}]
  %s1 = inlined_call_operand.vmem [shape: bf16[32,64], index: 1, kind: input, shape index: {}]
  %s2 = inlined_call_operand.vmem [shape: f32[1,64], index: 2, kind: input, shape index: {}]
  %s3 = inlined_call_operand.vmem [shape: bf16[32,128], index: 3, kind: input, shape index: {}]
  %s4 = inlined_call_operand.vmem [shape: f32[1,128], index: 4, kind: input, shape index: {}]
  %s5 = inlined_call_operand.vmem [shape: bf16[128,128], index: 5, kind: output, shape index: {}]
  %s6 = sld [smem:[#allocation0]]
  $region53: #{ppt_head.1} parent=0
    _
  %s8 = ssub.s32 1, %s6
  %s9 = scalar_select 0, %s8, %s6
  loop: start=0, step=1, limit=4
  $region2: #{ppt_head.1} parent=0 // loop_pre_header
    _
  $region3: #{ppt_head.1} parent=0 // loop_header
    %s11 = sphi 0, %s15
    %p12 = scmp.ge.s32.totalorder %s11, 4
    %s21 = sphi 0, %s23
    %s24 = sphi 0, %s21
    %s25 = sphi 0, %s24
    %s41 = sphi 0, %s25
    %s45 = sphi 0, %s45
    %s47 = sphi 0, %s45
    %s48 = sphi 0, %s47
    %s62 = sphi 0, %s48
    %s66 = sphi 0, %s66
    %s68 = sphi 0, %s66
    %s69 = sphi 0, %s68
    %s83 = sphi 0, %s69
    %s87 = sphi 0, %s87
    %s89 = sphi 0, %s87
    %s90 = sphi 0, %s89
    %s104 = sphi 0, %s90
    %s108 = sphi 0, %s108
    %s110 = sphi 0, %s108
    %s111 = sphi 0, %s110
    %s125 = sphi 0, %s111
    %s131 = sphi 0, %s133
    %s134 = sphi 0, %s131
    %s135 = sphi 0, %s134
    %s151 = sphi 0, %s135
  $region4: #{ppt_head.1} parent=0 // loop_header_branch
    %14 = sbr.rel (%p12) target = $region8
  $region5: #{ppt_head.1} parent=0 // loop_body
    %s16 = ssub.s32 %s11, 1
    %s17 = ssub.s32 %s11, 2
    %s18 = sadd.s32 %s11, 1
    %s19 = ssub.s32 %s11, %s18
    %p20 = scmp.eq.s32.totalorder %s19, 0
    %s22 = sadd.s32 %s21, 1
    %s23 = scalar_select %p20, %s21, %s22
    %p26 = pneg %p20
    %p27 = scmp.eq.s32.totalorder %s11, 1
    %p28 = por %p26, %p27
    %p29 = scmp.ne.s32.totalorder %s21, %s24
    %p30 = scmp.eq.s32.totalorder %s11, 0
    %p31 = por %p29, %p30
    %p32 = scmp.ne.s32.totalorder %s21, %s24
    %p33 = scmp.eq.s32.totalorder %s16, 1
    %p34 = por %p32, %p33
    %p35 = scmp.ne.s32.totalorder %s24, %s25
    %p36 = scmp.eq.s32.totalorder %s16, 0
    %p37 = por %p35, %p36
    %p38 = scmp.ne.s32.totalorder %s24, %s25
    %p39 = scmp.eq.s32.totalorder %s17, 1
    %p40 = por %p38, %p39
    %p42 = scmp.ne.s32.totalorder %s25, %s41
    %p43 = scmp.eq.s32.totalorder %s17, 0
    %p44 = por %p42, %p43
    %s46 = sadd.s32 %s45, 1
    %p49 = scmp.eq.s32.totalorder %s11, 1
    %p50 = scmp.ne.s32.totalorder %s45, %s47
    %p51 = scmp.eq.s32.totalorder %s11, 0
    %p52 = por %p50, %p51
    %p53 = scmp.ne.s32.totalorder %s45, %s47
    %p54 = scmp.eq.s32.totalorder %s16, 1
    %p55 = por %p53, %p54
    %p56 = scmp.ne.s32.totalorder %s47, %s48
    %p57 = scmp.eq.s32.totalorder %s16, 0
    %p58 = por %p56, %p57
    %p59 = scmp.ne.s32.totalorder %s47, %s48
    %p60 = scmp.eq.s32.totalorder %s17, 1
    %p61 = por %p59, %p60
    %p63 = scmp.ne.s32.totalorder %s48, %s62
    %p64 = scmp.eq.s32.totalorder %s17, 0
    %p65 = por %p63, %p64
    %s67 = sadd.s32 %s66, 1
    %p70 = scmp.eq.s32.totalorder %s11, 1
    %p71 = scmp.ne.s32.totalorder %s66, %s68
    %p72 = scmp.eq.s32.totalorder %s11, 0
    %p73 = por %p71, %p72
    %p74 = scmp.ne.s32.totalorder %s66, %s68
    %p75 = scmp.eq.s32.totalorder %s16, 1
    %p76 = por %p74, %p75
    %p77 = scmp.ne.s32.totalorder %s68, %s69
    %p78 = scmp.eq.s32.totalorder %s16, 0
    %p79 = por %p77, %p78
    %p80 = scmp.ne.s32.totalorder %s68, %s69
    %p81 = scmp.eq.s32.totalorder %s17, 1
    %p82 = por %p80, %p81
    %p84 = scmp.ne.s32.totalorder %s69, %s83
    %p85 = scmp.eq.s32.totalorder %s17, 0
    %p86 = por %p84, %p85
    %s88 = sadd.s32 %s87, 1
    %p91 = scmp.eq.s32.totalorder %s11, 1
    %p92 = scmp.ne.s32.totalorder %s87, %s89
    %p93 = scmp.eq.s32.totalorder %s11, 0
    %p94 = por %p92, %p93
    %p95 = scmp.ne.s32.totalorder %s87, %s89
    %p96 = scmp.eq.s32.totalorder %s16, 1
    %p97 = por %p95, %p96
    %p98 = scmp.ne.s32.totalorder %s89, %s90
    %p99 = scmp.eq.s32.totalorder %s16, 0
    %p100 = por %p98, %p99
    %p101 = scmp.ne.s32.totalorder %s89, %s90
    %p102 = scmp.eq.s32.totalorder %s17, 1
    %p103 = por %p101, %p102
    %p105 = scmp.ne.s32.totalorder %s90, %s104
    %p106 = scmp.eq.s32.totalorder %s17, 0
    %p107 = por %p105, %p106
    %s109 = sadd.s32 %s108, 1
    %p112 = scmp.eq.s32.totalorder %s11, 1
    %p113 = scmp.ne.s32.totalorder %s108, %s110
    %p114 = scmp.eq.s32.totalorder %s11, 0
    %p115 = por %p113, %p114
    %p116 = scmp.ne.s32.totalorder %s108, %s110
    %p117 = scmp.eq.s32.totalorder %s16, 1
    %p118 = por %p116, %p117
    %p119 = scmp.ne.s32.totalorder %s110, %s111
    %p120 = scmp.eq.s32.totalorder %s16, 0
    %p121 = por %p119, %p120
    %p122 = scmp.ne.s32.totalorder %s110, %s111
    %p123 = scmp.eq.s32.totalorder %s17, 1
    %p124 = por %p122, %p123
    %p126 = scmp.ne.s32.totalorder %s111, %s125
    %p127 = scmp.eq.s32.totalorder %s17, 0
    %p128 = por %p126, %p127
    %s129 = ssub.s32 %s11, %s18
    %p130 = scmp.eq.s32.totalorder %s129, 0
    %s132 = sadd.s32 %s131, 1
    %s133 = scalar_select %p130, %s131, %s132
    %p136 = pneg %p130
    %p137 = scmp.eq.s32.totalorder %s11, 1
    %p138 = por %p136, %p137
    %p139 = scmp.ne.s32.totalorder %s131, %s134
    %p140 = scmp.eq.s32.totalorder %s11, 0
    %p141 = por %p139, %p140
    %p142 = scmp.ne.s32.totalorder %s131, %s134
    %p143 = scmp.eq.s32.totalorder %s16, 1
    %p144 = por %p142, %p143
    %p145 = scmp.ne.s32.totalorder %s134, %s135
    %p146 = scmp.eq.s32.totalorder %s16, 0
    %p147 = por %p145, %p146
    %p148 = scmp.ne.s32.totalorder %s134, %s135
    %p149 = scmp.eq.s32.totalorder %s17, 1
    %p150 = por %p148, %p149
    %p152 = scmp.ne.s32.totalorder %s135, %s151
    %p153 = scmp.eq.s32.totalorder %s17, 0
    %p154 = por %p152, %p153
    %p155 = scmp.le.s32.totalorder 1, %s11
    %p156 = scmp.lt.s32.totalorder %s11, 3
    %p157 = pnand %p155, %p156
    %p158 = pneg %p157
    // Predicated region
    $region9: #{ppt_head.1} parent=5 // pred_check
      _
    $region10: #{ppt_head.1} parent=5 // pred_check_branch
      %160 = sbr.rel (%p157) target = $region12
    $region11: #{ppt_head.1} parent=5 // pred_region
      %s161 = ssub.s32 %s11, 1
      // Predicated region
      $region13: #{ppt_head.1} parent=11 // pred_check
        %p162 = pneg %p58
      $region14: #{ppt_head.1} parent=11 // pred_check_branch
        %164 = sbr.rel (%p162) target = $region16
      $region15: #{ppt_head.1} parent=11 // pred_region
        _
      $region16: #{ppt_head.1} parent=11 // pred_fallthru
        _
      // Predicated region
      $region17: #{ppt_head.1} parent=11 // pred_check
        %p165 = pneg %p79
      $region18: #{ppt_head.1} parent=11 // pred_check_branch
        %167 = sbr.rel (%p165) target = $region20
      $region19: #{ppt_head.1} parent=11 // pred_region
        _
      $region20: #{ppt_head.1} parent=11 // pred_fallthru
        _
      // Predicated region
      $region21: #{ppt_head.1} parent=11 // pred_check
        %p168 = pneg %p100
      $region22: #{ppt_head.1} parent=11 // pred_check_branch
        %170 = sbr.rel (%p168) target = $region24
      $region23: #{ppt_head.1} parent=11 // pred_region
        _
      $region24: #{ppt_head.1} parent=11 // pred_fallthru
        _
      // Predicated region
      $region25: #{ppt_head.1} parent=11 // pred_check
        %p171 = pneg %p121
      $region26: #{ppt_head.1} parent=11 // pred_check_branch
        %173 = sbr.rel (%p171) target = $region28
      $region27: #{ppt_head.1} parent=11 // pred_region
        _
      $region28: #{ppt_head.1} parent=11 // pred_fallthru
        _
    $region12: #{ppt_head.1} parent=5 // pred_fallthru
      _
    %p174 = scmp.lt.s32.totalorder %s11, 2
    // Predicated region
    $region29: #{ppt_head.1} parent=5 // pred_check
      %p175 = pneg %p174
    $region30: #{ppt_head.1} parent=5 // pred_check_branch
      %177 = sbr.rel (%p175) target = $region32
    $region31: #{ppt_head.1} parent=5 // pred_region
      // Predicated region
      $region33: #{ppt_head.1} parent=31 // pred_check
        %p178 = pneg %p31
      $region34: #{ppt_head.1} parent=31 // pred_check_branch
        %180 = sbr.rel (%p178) target = $region36
      $region35: #{ppt_head.1} parent=31 // pred_region
        %s181 = smul.u32 8, %s11
        %p182 = scmp.lt.s32.totalorder %s181, 15
        %s183 = scalar_select %p182, %s181, 15
        %s184 = smul.addr %s183, 8
        %s185 = scalar_lea.vmem %s0, %s184
        %s186 = smul.u32 8, %s11
      $region36: #{ppt_head.1} parent=31 // pred_fallthru
        _
    $region32: #{ppt_head.1} parent=5 // pred_fallthru
      _
    %p187 = scmp.le.s32.totalorder 1, %s11
    %p188 = scmp.lt.s32.totalorder %s11, 3
    %p189 = pnand %p187, %p188
    %p190 = pneg %p189
    // Predicated region
    $region37: #{ppt_head.1} parent=5 // pred_check
      _
    $region38: #{ppt_head.1} parent=5 // pred_check_branch
      %192 = sbr.rel (%p189) target = $region40
    $region39: #{ppt_head.1} parent=5 // pred_region
      %s193 = ssub.s32 %s11, 1
      %s194 = smul.u32 8, %s16
      %p195 = scmp.lt.s32.totalorder %s194, 15
      %s196 = scalar_select %p195, %s194, 15
      %s197 = smul.addr %s196, 8
      %s198 = scalar_lea.vmem %s0, %s197
      %p199 = pneg %p37
      %p200 = pneg %p34
      %p201 = pneg %p58
      %p202 = pneg %p55
      %p203 = pneg %p79
      %p204 = pneg %p76
      %p205 = pneg %p100
      %p206 = pneg %p97
      %p207 = pneg %p121
      %p208 = pneg %p118
      %p209 = pneg %p147
      %p210 = pneg %p144
      %s211 = smul.u32 8, %s16
      %p212 = scmp.lt.s32.totalorder %s211, 15
      %s213 = scalar_select %p212, %s211, 15
      %s214 = smul.addr %s213, 4
      %s215 = scalar_lea.vmem %s5, %s214
      %s216 = smul.u32 8, %s16
      %p217 = scmp.lt.s32.totalorder %s216, 15
      %s218 = scalar_select %p217, %s216, 15
      %s219 = smul.addr %s218, 8
      %s220 = scalar_lea.vmem %s0, %s219
      %s221 = smul.u32 8, %s16
      %s222 = smul.u32 8, %s16
      %p223 = scmp.lt.s32.totalorder %s222, 15
      %s224 = scalar_select %p223, %s222, 15
      %s225 = smul.addr %s224, 4
      %s226 = scalar_lea.vmem %s5, %s225
      %s227 = smul.u32 8, %s16
      %v229 = vld [vmem:[%s220] sm:$0xff]
      %v230 = vld [vmem:[%s220 + $0x8] sm:$0xff]
      %v231 = vld [vmem:[%s220 + $0x10] sm:$0xff]
      %v232 = vld [vmem:[%s220 + $0x18] sm:$0xff]
      %v233 = vld [vmem:[%s220 + $0x20] sm:$0xff]
      %v234 = vld [vmem:[%s220 + $0x28] sm:$0xff]
      %v235 = vld [vmem:[%s220 + $0x30] sm:$0xff]
      %v236 = vld [vmem:[%s220 + $0x38] sm:$0xff]
      %v237 = vpack.c.bf16 %v230, %v229
      %v238 = vpack.c.bf16 %v232, %v231
      %v239 = vpack.c.bf16 %v234, %v233
      %v240 = vpack.c.bf16 %v236, %v235
      %v241 = vld [vmem:[%s1] sm:$0xf]
      %v242 = vld [vmem:[%s1 + $0x4] sm:$0xf]
      %v243 = vld [vmem:[%s1 + $0x8] sm:$0xf]
      %v244 = vld [vmem:[%s1 + $0xc] sm:$0xf]
      %v245 = vld [vmem:[%s2] sm:$0x1]
      %v247 = vlaneseq
      %v248 = vshrl.u32 %v247, 7
      %v249 = vsub.s32 0, %v248
      %v250 = vrot.slane %v245, %v249
      %v256 = vunpack.c.l.b16 %v241
      %v257 = vunpack.c.l.b16 %v242
      %v258 = vunpack.c.l.b16 %v243
      %v259 = vunpack.c.l.b16 %v244
      %v260 = vpack.c.b16 %v257, %v256
      %v261 = vpack.c.b16 %v259, %v258
      %vm264 = vcmask 261120
      %v266 = vsel %vm264, %v237, 0
      %v269 = vsel %vm264, %v238, 0
      %v272 = vsel %vm264, %v239, 0
      %v275 = vsel %vm264, %v240, 0
      %277 = vmatprep.subr.bf16.mxu0 0
      %278 = vmatpush1.bf16.msra.mxu0 %v260
      %279 = vmatprep.subr.bf16.mxu0 0
      %280 = vmatpush1.bf16.msra.mxu0 %v261
      %281 = vmatprep.subr.bf16.mxu0 0
      %282 = vmatpush1.bf16.msra.mxu0 0
      %283 = vmatprep.subr.bf16.mxu0 0
      %284 = vmatpush1.bf16.msra.mxu0 0
      %285 = vmatprep.subr.bf16.mxu0 0
      %286 = vmatpush1.bf16.msra.mxu0 0
      %287 = vmatprep.subr.bf16.mxu0 0
      %288 = vmatpush1.bf16.msra.mxu0 0
      %289 = vmatprep.subr.bf16.mxu0 0
      %290 = vmatpush1.bf16.msra.mxu0 0
      %291 = vmatprep.subr.bf16.mxu0 0
      %292 = vmatpush1.bf16.msra.mxu0 0
      %293 = vmatprep.subr.bf16.mxu0 0
      %294 = vmatpush1.bf16.msra.mxu0 0
      %295 = vmatprep.subr.bf16.mxu0 0
      %296 = vmatpush1.bf16.msra.mxu0 0
      %297 = vmatprep.subr.bf16.mxu0 0
      %298 = vmatpush1.bf16.msra.mxu0 0
      %299 = vmatprep.subr.bf16.mxu0 0
      %300 = vmatpush1.bf16.msra.mxu0 0
      %301 = vmatprep.subr.bf16.mxu0 0
      %302 = vmatpush1.bf16.msra.mxu0 0
      %303 = vmatprep.subr.bf16.mxu0 0
      %304 = vmatpush1.bf16.msra.mxu0 0
      %305 = vmatprep.subr.bf16.mxu0 0
      %306 = vmatpush1.bf16.msra.mxu0 0
      %307 = vmatprep.subr.bf16.mxu0 0
      %308 = vmatpush1.bf16.msra.mxu0 0
      %309 = vmatprep.mubr.bf16.mxu0 0
      %310 = vmatmul.mubr.bf16.gmra.mrb[0].mxu0 %v266
      %v311 = vpop.f32.mrb[0].mxu0
      %v312 = vadd.f32 %v250, %v311
      %v313 = vpop.f32.mrb[0].mxu0
      %v314 = vpop.f32.mrb[0].mxu0
      %v315 = vadd.f32 %v250, %v314
      %v316 = vpop.f32.mrb[0].mxu0
      %317 = vmatprep.mubr.bf16.mxu0 0
      %318 = vmatmul.mubr.bf16.gmra.mrb[0].mxu0 %v269
      %v319 = vpop.f32.mrb[0].mxu0
      %v320 = vadd.f32 %v250, %v319
      %v321 = vpop.f32.mrb[0].mxu0
      %v322 = vpop.f32.mrb[0].mxu0
      %v323 = vadd.f32 %v250, %v322
      %v324 = vpop.f32.mrb[0].mxu0
      %325 = vmatprep.mubr.bf16.mxu0 0
      %326 = vmatmul.mubr.bf16.gmra.mrb[0].mxu0 %v272
      %v327 = vpop.f32.mrb[0].mxu0
      %v328 = vadd.f32 %v250, %v327
      %v329 = vpop.f32.mrb[0].mxu0
      %v330 = vpop.f32.mrb[0].mxu0
      %v331 = vadd.f32 %v250, %v330
      %v332 = vpop.f32.mrb[0].mxu0
      %333 = vmatprep.mubr.bf16.mxu0 0
      %334 = vmatmul.mubr.bf16.gmra.mrb[0].mxu0 %v275
      %v335 = vpop.f32.mrb[0].mxu0
      %v336 = vadd.f32 %v250, %v335
      %v337 = vpop.f32.mrb[0].mxu0
      %v338 = vpop.f32.mrb[0].mxu0
      %v339 = vadd.f32 %v250, %v338
      %v340 = vpop.f32.mrb[0].mxu0
      %341 = vdwg.mxu0
      %v342 = vmul.f32 %v312, %v312
      %v343 = vmul.f32 %v315, %v315
      %v344 = vmul.f32 %v320, %v320
      %v345 = vmul.f32 %v323, %v323
      %v346 = vmul.f32 %v328, %v328
      %v347 = vmul.f32 %v331, %v331
      %v348 = vmul.f32 %v336, %v336
      %v349 = vmul.f32 %v339, %v339
      %vm350 = vcmask 523264
      %v351 = vsel %vm350, %v342, 0.0
      %352 = vadd.xlane.f32.xlu0 %v351
      %v353 = vpop.xlane.xlu0 %352
      %v354 = vsel %vm350, %v343, 0.0
      %355 = vadd.xlane.f32.xlu0 %v354
      %v356 = vpop.xlane.xlu0 %355
      %v357 = vsel %vm350, %v344, 0.0
      %358 = vadd.xlane.f32.xlu0 %v357
      %v359 = vpop.xlane.xlu0 %358
      %v360 = vsel %vm350, %v345, 0.0
      %361 = vadd.xlane.f32.xlu0 %v360
      %v362 = vpop.xlane.xlu0 %361
      %v363 = vsel %vm350, %v346, 0.0
      %364 = vadd.xlane.f32.xlu0 %v363
      %v365 = vpop.xlane.xlu0 %364
      %v366 = vsel %vm350, %v347, 0.0
      %367 = vadd.xlane.f32.xlu0 %v366
      %v368 = vpop.xlane.xlu0 %367
      %v369 = vsel %vm350, %v348, 0.0
      %370 = vadd.xlane.f32.xlu0 %v369
      %v371 = vpop.xlane.xlu0 %370
      %v372 = vsel %vm350, %v349, 0.0
      %373 = vadd.xlane.f32.xlu0 %v372
      %v374 = vpop.xlane.xlu0 %373
      %v375 = vmax.f32 %v353, 1e-24
      %v376 = vmax.f32 %v356, 1e-24
      %v377 = vmax.f32 %v359, 1e-24
      %v378 = vmax.f32 %v362, 1e-24
      %v379 = vmax.f32 %v365, 1e-24
      %v380 = vmax.f32 %v368, 1e-24
      %v381 = vmax.f32 %v371, 1e-24
      %v382 = vmax.f32 %v374, 1e-24
      %v383 = vrsqrt.pop %v375
      %v384 = vrsqrt.pop %v376
      %v385 = vrsqrt.pop %v377
      %v386 = vrsqrt.pop %v378
      %v387 = vrsqrt.pop %v379
      %v388 = vrsqrt.pop %v380
      %v389 = vrsqrt.pop %v381
      %v390 = vrsqrt.pop %v382
      %v391 = vld [vmem:[%s3] sm:$0xf]
      %v392 = vld [vmem:[%s3 + $0x4] sm:$0xf]
      %v393 = vld [vmem:[%s3 + $0x8] sm:$0xf]
      %v394 = vld [vmem:[%s3 + $0xc] sm:$0xf]
      %v395 = vld [vmem:[%s4] sm:$0x1]
      %v397 = vlaneseq
      %v398 = vshrl.u32 %v397, 7
      %v399 = vsub.s32 0, %v398
      %v400 = vrot.slane %v395, %v399
      %v406 = vunpack.c.l.b16 %v391
      %v407 = vunpack.c.l.b16 %v392
      %v408 = vunpack.c.l.b16 %v393
      %v409 = vunpack.c.l.b16 %v394
      %v410 = vpack.c.b16 %v407, %v406
      %v411 = vpack.c.b16 %v409, %v408
      %414 = vmatprep.subr.bf16.mxu0 0
      %415 = vmatpush1.bf16.msra.mxu0 %v410
      %416 = vmatprep.subr.bf16.mxu0 0
      %417 = vmatpush1.bf16.msra.mxu0 %v411
      %418 = vmatprep.subr.bf16.mxu0 0
      %419 = vmatpush1.bf16.msra.mxu0 0
      %420 = vmatprep.subr.bf16.mxu0 0
      %421 = vmatpush1.bf16.msra.mxu0 0
      %422 = vmatprep.subr.bf16.mxu0 0
      %423 = vmatpush1.bf16.msra.mxu0 0
      %424 = vmatprep.subr.bf16.mxu0 0
      %425 = vmatpush1.bf16.msra.mxu0 0
      %426 = vmatprep.subr.bf16.mxu0 0
      %427 = vmatpush1.bf16.msra.mxu0 0
      %428 = vmatprep.subr.bf16.mxu0 0
      %429 = vmatpush1.bf16.msra.mxu0 0
      %430 = vmatprep.subr.bf16.mxu0 0
      %431 = vmatpush1.bf16.msra.mxu0 0
      %432 = vmatprep.subr.bf16.mxu0 0
      %433 = vmatpush1.bf16.msra.mxu0 0
      %434 = vmatprep.subr.bf16.mxu0 0
      %435 = vmatpush1.bf16.msra.mxu0 0
      %436 = vmatprep.subr.bf16.mxu0 0
      %437 = vmatpush1.bf16.msra.mxu0 0
      %438 = vmatprep.subr.bf16.mxu0 0
      %439 = vmatpush1.bf16.msra.mxu0 0
      %440 = vmatprep.subr.bf16.mxu0 0
      %441 = vmatpush1.bf16.msra.mxu0 0
      %442 = vmatprep.subr.bf16.mxu0 0
      %443 = vmatpush1.bf16.msra.mxu0 0
      %444 = vmatprep.subr.bf16.mxu0 0
      %445 = vmatpush1.bf16.msra.mxu0 0
      %446 = vmatprep.mubr.bf16.mxu0 0
      %447 = vmatmul.mubr.bf16.gmra.mrb[0].mxu0 %v266
      %v448 = vpop.f32.mrb[0].mxu0
      %v449 = vadd.f32 %v400, %v448
      %v450 = vpop.f32.mrb[0].mxu0
      %v451 = vpop.f32.mrb[0].mxu0
      %v452 = vadd.f32 %v400, %v451
      %v453 = vpop.f32.mrb[0].mxu0
      %454 = vmatprep.mubr.bf16.mxu0 0
      %455 = vmatmul.mubr.bf16.gmra.mrb[0].mxu0 %v269
      %v456 = vpop.f32.mrb[0].mxu0
      %v457 = vadd.f32 %v400, %v456
      %v458 = vpop.f32.mrb[0].mxu0
      %v459 = vpop.f32.mrb[0].mxu0
      %v460 = vadd.f32 %v400, %v459
      %v461 = vpop.f32.mrb[0].mxu0
      %462 = vmatprep.mubr.bf16.mxu0 0
      %463 = vmatmul.mubr.bf16.gmra.mrb[0].mxu0 %v272
      %v464 = vpop.f32.mrb[0].mxu0
      %v465 = vadd.f32 %v400, %v464
      %v466 = vpop.f32.mrb[0].mxu0
      %v467 = vpop.f32.mrb[0].mxu0
      %v468 = vadd.f32 %v400, %v467
      %v469 = vpop.f32.mrb[0].mxu0
      %470 = vmatprep.mubr.bf16.mxu0 0
      %471 = vmatmul.mubr.bf16.gmra.mrb[0].mxu0 %v275
      %v472 = vpop.f32.mrb[0].mxu0
      %v473 = vadd.f32 %v400, %v472
      %v474 = vpop.f32.mrb[0].mxu0
      %v475 = vpop.f32.mrb[0].mxu0
      %v476 = vadd.f32 %v400, %v475
      %v477 = vpop.f32.mrb[0].mxu0
      %478 = vdwg.mxu0
      %v479 = vmul.f32 %v449, %v383
      %v480 = vmul.f32 %v452, %v384
      %v481 = vmul.f32 %v457, %v385
      %v482 = vmul.f32 %v460, %v386
      %v483 = vmul.f32 %v465, %v387
      %v484 = vmul.f32 %v468, %v388
      %v485 = vmul.f32 %v473, %v389
      %v486 = vmul.f32 %v476, %v390
      %v487 = vpack.c.bf16 %v480, %v479
      %v488 = vpack.c.bf16 %v482, %v481
      %v489 = vpack.c.bf16 %v484, %v483
      %v490 = vpack.c.bf16 %v486, %v485
      %v495 = vunpack.c.l.b16 %v487
      %v496 = vunpack.c.h.b16 %v487
      %v497 = vunpack.c.l.b16 %v488
      %v498 = vunpack.c.h.b16 %v488
      %v499 = vunpack.c.l.b16 %v489
      %v500 = vunpack.c.h.b16 %v489
      %v501 = vunpack.c.l.b16 %v490
      %v502 = vunpack.c.h.b16 %v490
      %v503 = vpack.c.b16 %v495, %v495
      %v504 = vpack.c.b16 %v496, %v496
      %v505 = vpack.c.b16 %v497, %v497
      %v506 = vpack.c.b16 %v498, %v498
      %v507 = vpack.c.b16 %v499, %v499
      %v508 = vpack.c.b16 %v500, %v500
      %v509 = vpack.c.b16 %v501, %v501
      %v510 = vpack.c.b16 %v502, %v502
      %519 = vst [vmem:[%s226] sm:$0xf] %v503
      %520 = vst [vmem:[%s226 + $0x4] sm:$0xf] %v504
      %521 = vst [vmem:[%s226 + $0x8] sm:$0xf] %v505
      %522 = vst [vmem:[%s226 + $0xc] sm:$0xf] %v506
      %523 = vst [vmem:[%s226 + $0x10] sm:$0xf] %v507
      %524 = vst [vmem:[%s226 + $0x14] sm:$0xf] %v508
      %525 = vst [vmem:[%s226 + $0x18] sm:$0xf] %v509
      %526 = vst [vmem:[%s226 + $0x1c] sm:$0xf] %v510
      %s527 = smul.u32 8, %s16
      %p528 = scmp.lt.s32.totalorder %s527, 15
      %s529 = scalar_select %p528, %s527, 15
      %s530 = smul.addr %s529, 4
      %s531 = scalar_lea.vmem %s5, %s530
      // Predicated region
      $region41: #{ppt_head.1} parent=39 // pred_check
        %p532 = pneg %p144
      $region42: #{ppt_head.1} parent=39 // pred_check_branch
        %534 = sbr.rel (%p532) target = $region44
      $region43: #{ppt_head.1} parent=39 // pred_region
        %s535 = smul.u32 8, %s16
      $region44: #{ppt_head.1} parent=39 // pred_fallthru
        _
    $region40: #{ppt_head.1} parent=5 // pred_fallthru
      _
    %p536 = scmp.le.s32.totalorder 2, %s11
    // Predicated region
    $region45: #{ppt_head.1} parent=5 // pred_check
      %p537 = pneg %p536
    $region46: #{ppt_head.1} parent=5 // pred_check_branch
      %539 = sbr.rel (%p537) target = $region48
    $region47: #{ppt_head.1} parent=5 // pred_region
      %s540 = ssub.s32 %s11, 2
      // Predicated region
      $region49: #{ppt_head.1} parent=47 // pred_check
        %p541 = pneg %p150
      $region50: #{ppt_head.1} parent=47 // pred_check_branch
        %543 = sbr.rel (%p541) target = $region52
      $region51: #{ppt_head.1} parent=47 // pred_region
        %s544 = smul.u32 8, %s17
        %p545 = scmp.lt.s32.totalorder %s544, 15
        %s546 = scalar_select %p545, %s544, 15
        %s547 = smul.addr %s546, 4
        %s548 = scalar_lea.vmem %s5, %s547
      $region52: #{ppt_head.1} parent=47 // pred_fallthru
        _
    $region48: #{ppt_head.1} parent=5 // pred_fallthru
      _
  $region6: #{ppt_head.1} parent=0 // loop_footer
    %s15 = sadd.s32 1, %s11
  $region7: #{ppt_head.1} parent=0 // loop_footer_branch
    %10 = sbr.rel target = $region3
  $region8: #{ppt_head.1} parent=0 // loop_exit
    _

</llo_original>
